<compile_context>
chip_gen: v7x
topology: tpu7x:2x2x1
jax: 0.10.0
libtpu: 0.0.40
codegen_flags: <defaults>
</compile_context>

<pallas_src>
import jax
import jax.numpy as jnp
from jax.experimental import pallas as pl
from jax.experimental.pallas import tpu as pltpu

STATE_DIM = 13
STATE_PAD = 16                        # state columns zero-padded to 16; col 15 == 1.0 (bias column)
ACTION_DIM = 4
HIDDEN_DIM = 128
PERC_DIM = 4
PERC_HIDDEN = 32
FUSED_DIM = HIDDEN_DIM + PERC_HIDDEN  # 160 : fused feature|perception width

_BIAS_ROWS = 16                                    # bias block appended to slab1 (3 rows used)
SLAB1_ROWS = STATE_PAD + FUSED_DIM + _BIAS_ROWS    # 192
SLAB2_ROWS = FUSED_DIM + HIDDEN_DIM                # 288


def _ppo_kernel(x_ref, slab1_ref, slab2_ref, out_ref):
    """One row-tile of the fused PPOPolicy MLP. Weights are resident bf16 slabs."""
    x = x_ref[...]                                                              # (tm, 16) f32
    w1 = slab1_ref[0:STATE_PAD, :].astype(jnp.float32)                          # (16, 160)
    w2 = slab1_ref[STATE_PAD:STATE_PAD + FUSED_DIM, :].astype(jnp.float32)      # (160, 160)
    b = slab1_ref[STATE_PAD + FUSED_DIM:SLAB1_ROWS, :].astype(jnp.float32)      # (16, 160)
    w3 = slab2_ref[0:FUSED_DIM, :].astype(jnp.float32)                          # (160, 128)
    w4 = slab2_ref[FUSED_DIM:SLAB2_ROWS, :].astype(jnp.float32)                 # (128, 128)

    # Fused layer 1: [feature_net.0 | perception_net.0] -> ReLU.
    # Bias folded into w1 row 15 via the constant-1 state column (no vadd on the chain).
    h = jnp.maximum(jnp.dot(x, w1, preferred_element_type=jnp.float32), 0.0)    # (tm, 160)

    # Fused layer 2 (block-diagonal [[fw2, 0], [0, pw2]]) -> ReLU.
    # TODO(synk): split into 128x128 + 32x32 dots on v5e (128x128 MXU); keep fused on v6e/v7x.
    h = jnp.maximum(jnp.dot(h, w2, preferred_element_type=jnp.float32) + b[0:1, :], 0.0)

    # combined_net: Linear(160, 128) -> ReLU (concat folded into the weight layout).
    c = jnp.maximum(
        jnp.dot(h, w3, preferred_element_type=jnp.float32) + b[1:2, :HIDDEN_DIM], 0.0)

    # Fused heads: lanes 0..3 = policy_mean (tanh), lane 4 = value, lanes 5..127 = 0.
    head = jnp.dot(c, w4, preferred_element_type=jnp.float32) + b[2:3, :HIDDEN_DIM]
    lane = jax.lax.broadcasted_iota(jnp.int32, head.shape, 1)
    out_ref[...] = jnp.where(lane < ACTION_DIM, jnp.tanh(head), head)


def _xavier_uniform(key, fan_in, fan_out):
    bound = jnp.sqrt(6.0 / (fan_in + fan_out))
    return jax.random.uniform(key, (fan_in, fan_out), jnp.float32, -bound, bound)


def init_ppo_params(key, state_dim=STATE_DIM, action_dim=ACTION_DIM, hidden_dim=HIDDEN_DIM):
    """Mirrors PPOPolicy._init_weights: xavier_uniform weights ([in, out] layout),
    zero biases, zero log_std."""
    keys = jax.random.split(key, 8)
    cw_full = _xavier_uniform(keys[4], hidden_dim + PERC_HIDDEN, hidden_dim)
    return {
        "fw1": _xavier_uniform(keys[0], state_dim, hidden_dim),
        "fb1": jnp.zeros((hidden_dim,), jnp.float32),
        "fw2": _xavier_uniform(keys[1], hidden_dim, hidden_dim),
        "fb2": jnp.zeros((hidden_dim,), jnp.float32),
        "pw1": _xavier_uniform(keys[2], PERC_DIM, PERC_HIDDEN),
        "pb1": jnp.zeros((PERC_HIDDEN,), jnp.float32),
        "pw2": _xavier_uniform(keys[3], PERC_HIDDEN, PERC_HIDDEN),
        "pb2": jnp.zeros((PERC_HIDDEN,), jnp.float32),
        "cwf": cw_full[:hidden_dim, :],        # combined weight, feature rows
        "cwp": cw_full[hidden_dim:, :],        # combined weight, perception rows
        "cb": jnp.zeros((hidden_dim,), jnp.float32),
        "pmw": _xavier_uniform(keys[5], hidden_dim, action_dim),
        "pmb": jnp.zeros((action_dim,), jnp.float32),
        "vw": _xavier_uniform(keys[6], hidden_dim, 1),
        "vb": jnp.zeros((1,), jnp.float32),
        "log_std": jnp.zeros((action_dim,), jnp.float32),
    }


def pack_params(p, dtype=jnp.bfloat16):
    """Pack the 17 module tensors into 2 bf16 kernel slabs + host-precomputed std."""
    H, A = HIDDEN_DIM, ACTION_DIM

    # Fused layer-1 weight (16, 160): fw1 in lanes 0..127, pw1 embedded at input rows 9..12,
    # layer-1 biases folded into row 15 (matched by the constant-1 state column).
    w1f = jnp.zeros((STATE_PAD, FUSED_DIM), jnp.float32)
    w1f = w1f.at[:STATE_DIM, :H].set(p["fw1"])
    w1f = w1f.at[9:9 + PERC_DIM, H:].set(p["pw1"])
    w1f = w1f.at[STATE_PAD - 1, :H].set(p["fb1"])
    w1f = w1f.at[STATE_PAD - 1, H:].set(p["pb1"])

    # Fused layer-2 weight (160, 160): block-diagonal [[fw2, 0], [0, pw2]].
    w2f = jnp.zeros((FUSED_DIM, FUSED_DIM), jnp.float32)
    w2f = w2f.at[:H, :H].set(p["fw2"])
    w2f = w2f.at[H:, H:].set(p["pw2"])

    # Remaining biases: one sublane row each (row 0: layer-2, row 1: combined, row 2: heads).
    bias = jnp.zeros((_BIAS_ROWS, FUSED_DIM), jnp.float32)
    bias = bias.at[0, :H].set(p["fb2"]).at[0, H:].set(p["pb2"])
    bias = bias.at[1, :H].set(p["cb"])
    bias = bias.at[2, :A].set(p["pmb"]).at[2, A:A + 1].set(p["vb"])

    slab1 = jnp.concatenate([w1f, w2f, bias], axis=0).astype(dtype)     # (192, 160)

    # Combined weight (160, 128) = [cwf; cwp]; fused head weight (128, 128).
    w3 = jnp.concatenate([p["cwf"], p["cwp"]], axis=0)                   # (160, 128)
    w4 = jnp.zeros((H, H), jnp.float32)
    w4 = w4.at[:, :A].set(p["pmw"])
    w4 = w4.at[:, A:A + 1].set(p["vw"])
    slab2 = jnp.concatenate([w3, w4], axis=0).astype(dtype)              # (288, 128)

    # action_std depends only on parameters: compute once on the host, not per call.
    action_std = jnp.exp(jnp.clip(p["log_std"], -5.0, 2.0)).astype(jnp.float32)
    return {"slab1": slab1, "slab2": slab2, "action_std": action_std}


def ppo_policy_forward(state, packed, *, tile_m=256):
    """Equivalent of PPOPolicy.forward: returns (action_mean [B,4], action_std [4], value [B,1]).

    Rows are tiled over a 1-D "parallel" grid; the weight slabs' index_map returns the
    same block every iteration, so they are DMA'd once per call and stay VMEM-resident.
    Batch many environments / timesteps into one call to amortize launch + weight DMA."""
    if state.ndim == 1:
        state = state[None, :]
    state = state.astype(jnp.float32)
    B = state.shape[0]

    tm = min(int(tile_m), max(8, ((B + 7) // 8) * 8))
    tm = ((tm + 7) // 8) * 8
    n_rows = ((B + tm - 1) // tm) * tm
    grid = (n_rows // tm,)

    x = jnp.zeros((n_rows, STATE_PAD), jnp.float32)
    x = x.at[:B, :STATE_DIM].set(state)
    x = x.at[:, STATE_PAD - 1].set(1.0)   # constant-1 column: folds the layer-1 bias into w1

    out = pl.pallas_call(
        _ppo_kernel,
        out_shape=jax.ShapeDtypeStruct((n_rows, HIDDEN_DIM), jnp.float32),
        grid_spec=pltpu.PrefetchScalarGridSpec(
            num_scalar_prefetch=0,
            grid=grid,
            in_specs=[
                pl.BlockSpec((tm, STATE_PAD), lambda i: (i, 0)),
                pl.BlockSpec((SLAB1_ROWS, FUSED_DIM), lambda i: (0, 0)),   # resident weights
                pl.BlockSpec((SLAB2_ROWS, HIDDEN_DIM), lambda i: (0, 0)),  # resident weights
            ],
            out_specs=pl.BlockSpec((tm, HIDDEN_DIM), lambda i: (i, 0)),
        ),
        compiler_params=pltpu.CompilerParams(dimension_semantics=("parallel",)),
    )(x, packed["slab1"], packed["slab2"])

    action_mean = out[:B, :ACTION_DIM]
    value = out[:B, ACTION_DIM:ACTION_DIM + 1]
    return action_mean, packed["action_std"], value


def _reference_forward(state, p):
    """Pure-JAX reference mirroring the original (unfused) PyTorch module structure."""
    if state.ndim == 1:
        state = state[None, :]
    perc = state[:, 9:13]
    h = jnp.maximum(state @ p["fw1"] + p["fb1"], 0.0)
    h = jnp.maximum(h @ p["fw2"] + p["fb2"], 0.0)
    q = jnp.maximum(perc @ p["pw1"] + p["pb1"], 0.0)
    q = jnp.maximum(q @ p["pw2"] + p["pb2"], 0.0)
    c = jnp.maximum(h @ p["cwf"] + q @ p["cwp"] + p["cb"], 0.0)
    mean = jnp.tanh(c @ p["pmw"] + p["pmb"])
    value = c @ p["vw"] + p["vb"]
    std = jnp.exp(jnp.clip(p["log_std"], -5.0, 2.0))
    return mean, std, value


def _quantize_like_slabs(p):
    """Model the kernel's bf16 weight storage: round-trip everything except log_std."""
    return {k: (v if k == "log_std" else v.astype(jnp.bfloat16).astype(jnp.float32))
            for k, v in p.items()}


if __name__ == "__main__":
    key = jax.random.PRNGKey(0)
    pkey, skey = jax.random.split(key)

    params = init_ppo_params(pkey)
    # Give biases / log_std nonzero values so the test exercises every bias-folding path
    # (the module's init zeroes them, which would hide bias-handling bugs).
    bias_names = ["fb1", "fb2", "pb1", "pb2", "cb", "pmb", "vb", "log_std"]
    for name, bkey in zip(bias_names, jax.random.split(jax.random.PRNGKey(1), len(bias_names))):
        params[name] = 0.1 * jax.random.normal(bkey, params[name].shape, jnp.float32)

    packed = pack_params(params)

    batch = 2
    state = jax.random.normal(skey, (batch, STATE_DIM), jnp.float32)

    fwd = jax.jit(ppo_policy_forward, static_argnames=("tile_m",))
    action_mean, action_std, value = fwd(state, packed)
    jax.block_until_ready((action_mean, action_std, value))

    assert action_mean.shape == (batch, ACTION_DIM)
    assert action_std.shape == (ACTION_DIM,)
    assert value.shape == (batch, 1)

    # Tolerance sized for bf16 weight storage + default (bf16-pass) MXU precision; in
    # practice agreement is far tighter.  Structural bugs produce O(0.1+) errors.
    TOL = 2e-2
    q_mean, q_std, q_value = _reference_forward(state, _quantize_like_slabs(params))
    r_mean, r_std, r_value = _reference_forward(state, params)
    for ref_mean, ref_value in ((q_mean, q_value), (r_mean, r_value)):
        assert jnp.allclose(action_mean, ref_mean, atol=TOL), \
            float(jnp.max(jnp.abs(action_mean - ref_mean)))
        assert jnp.allclose(value, ref_value, atol=TOL), \
            float(jnp.max(jnp.abs(value - ref_value)))
    assert jnp.allclose(action_std, r_std, atol=1e-6)

    # Exercise the multi-tile (gridded, weight-resident) path with a larger batch.
    big_state = jax.random.normal(jax.random.PRNGKey(2), (40, STATE_DIM), jnp.float32)
    b_mean, b_std, b_value = fwd(big_state, packed, tile_m=8)   # grid = (5,), weights resident
    jax.block_until_ready((b_mean, b_std, b_value))
    rb_mean, _, rb_value = _reference_forward(big_state, params)
    assert b_mean.shape == (40, ACTION_DIM) and b_value.shape == (40, 1)
    assert jnp.allclose(b_mean, rb_mean, atol=TOL), float(jnp.max(jnp.abs(b_mean - rb_mean)))
    assert jnp.allclose(b_value, rb_value, atol=TOL), float(jnp.max(jnp.abs(b_value - rb_value)))

    print("KERNEL_OK")
</pallas_src>

<mosaic_0001>
module attributes {stable_mosaic.version = 11 : i64} {
  func.func @_ppo_kernel(%arg0: i32, %arg1: memref<8x16xf32, #tpu.memory_space<vmem>>, %arg2: memref<192x160xbf16, #tpu.memory_space<vmem>>, %arg3: memref<288x128xbf16, #tpu.memory_space<vmem>>, %arg4: memref<8x128xf32, #tpu.memory_space<vmem>>) attributes {dimension_semantics = [#tpu.dimension_semantics<parallel>], iteration_bounds = array<i64: 1>, scalar_prefetch = 0 : i64, scratch_operands = 0 : i64, tpu.core_type = #tpu.core_type<tc>, window_params = [{transform_indices = @transform_0, window_bounds = array<i64: 8, 16>}, {pipeline_mode = #tpu.pipeline_mode<synchronous>, transform_indices = @transform_1, window_bounds = array<i64: 192, 160>}, {pipeline_mode = #tpu.pipeline_mode<synchronous>, transform_indices = @transform_2, window_bounds = array<i64: 288, 128>}, {transform_indices = @transform_3, window_bounds = array<i64: 8, 128>}]} {
    %c0 = arith.constant 0 : index
    %c0_0 = arith.constant 0 : index
    %0 = vector.load %arg1[%c0, %c0_0] : memref<8x16xf32, #tpu.memory_space<vmem>>, vector<8x16xf32>
    %c0_1 = arith.constant 0 : index
    %c0_2 = arith.constant 0 : index
    %1 = vector.load %arg2[%c0_1, %c0_2] : memref<192x160xbf16, #tpu.memory_space<vmem>>, vector<16x160xbf16>
    %2 = arith.extf %1 : vector<16x160xbf16> to vector<16x160xf32>
    %c16 = arith.constant 16 : index
    %c0_3 = arith.constant 0 : index
    %3 = vector.load %arg2[%c16, %c0_3] : memref<192x160xbf16, #tpu.memory_space<vmem>>, vector<160x160xbf16>
    %4 = arith.extf %3 : vector<160x160xbf16> to vector<160x160xf32>
    %c176 = arith.constant 176 : index
    %c0_4 = arith.constant 0 : index
    %5 = vector.load %arg2[%c176, %c0_4] : memref<192x160xbf16, #tpu.memory_space<vmem>>, vector<16x160xbf16>
    %6 = arith.extf %5 : vector<16x160xbf16> to vector<16x160xf32>
    %c0_5 = arith.constant 0 : index
    %c0_6 = arith.constant 0 : index
    %7 = vector.load %arg3[%c0_5, %c0_6] : memref<288x128xbf16, #tpu.memory_space<vmem>>, vector<160x128xbf16>
    %8 = arith.extf %7 : vector<160x128xbf16> to vector<160x128xf32>
    %c160 = arith.constant 160 : index
    %c0_7 = arith.constant 0 : index
    %9 = vector.load %arg3[%c160, %c0_7] : memref<288x128xbf16, #tpu.memory_space<vmem>>, vector<128x128xbf16>
    %10 = arith.extf %9 : vector<128x128xbf16> to vector<128x128xf32>
    %cst = arith.constant dense<0.000000e+00> : vector<8x160xf32>
    %11 = tpu.matmul %0, %2, %cst {dimension_numbers = #tpu.dot_dimension_numbers<[1], [0], [0], [1], [0, 0, 1, 1], [], []>} : vector<8x16xf32>, vector<16x160xf32>, vector<8x160xf32> -> vector<8x160xf32>
    %cst_8 = arith.constant 0.000000e+00 : f32
    %12 = vector.broadcast %cst_8 : f32 to vector<8x160xf32>
    %13 = arith.maximumf %11, %12 : vector<8x160xf32>
    %cst_9 = arith.constant dense<0.000000e+00> : vector<8x160xf32>
    %14 = tpu.matmul %13, %4, %cst_9 {dimension_numbers = #tpu.dot_dimension_numbers<[1], [0], [0], [1], [0, 0, 1, 1], [], []>} : vector<8x160xf32>, vector<160x160xf32>, vector<8x160xf32> -> vector<8x160xf32>
    %15 = vector.extract_strided_slice %6 {offsets = [0, 0], sizes = [1, 160], strides = [1, 1]} : vector<16x160xf32> to vector<1x160xf32>
    %16 = vector.broadcast %15 : vector<1x160xf32> to vector<8x160xf32>
    %17 = arith.addf %14, %16 : vector<8x160xf32>
    %cst_10 = arith.constant 0.000000e+00 : f32
    %18 = vector.broadcast %cst_10 : f32 to vector<8x160xf32>
    %19 = arith.maximumf %17, %18 : vector<8x160xf32>
    %cst_11 = arith.constant dense<0.000000e+00> : vector<8x128xf32>
    %20 = tpu.matmul %19, %8, %cst_11 {dimension_numbers = #tpu.dot_dimension_numbers<[1], [0], [0], [1], [0, 0, 1, 1], [], []>} : vector<8x160xf32>, vector<160x128xf32>, vector<8x128xf32> -> vector<8x128xf32>
    %21 = vector.extract_strided_slice %6 {offsets = [1, 0], sizes = [1, 128], strides = [1, 1]} : vector<16x160xf32> to vector<1x128xf32>
    %22 = vector.broadcast %21 : vector<1x128xf32> to vector<8x128xf32>
    %23 = arith.addf %20, %22 : vector<8x128xf32>
    %cst_12 = arith.constant 0.000000e+00 : f32
    %24 = vector.broadcast %cst_12 : f32 to vector<8x128xf32>
    %25 = arith.maximumf %23, %24 : vector<8x128xf32>
    %cst_13 = arith.constant dense<0.000000e+00> : vector<8x128xf32>
    %26 = tpu.matmul %25, %10, %cst_13 {dimension_numbers = #tpu.dot_dimension_numbers<[1], [0], [0], [1], [0, 0, 1, 1], [], []>} : vector<8x128xf32>, vector<128x128xf32>, vector<8x128xf32> -> vector<8x128xf32>
    %27 = vector.extract_strided_slice %6 {offsets = [2, 0], sizes = [1, 128], strides = [1, 1]} : vector<16x160xf32> to vector<1x128xf32>
    %28 = vector.broadcast %27 : vector<1x128xf32> to vector<8x128xf32>
    %29 = arith.addf %26, %28 : vector<8x128xf32>
    %30 = tpu.iota {dimensions = array<i32: 1>} : vector<8x128xi32>
    %c4_i32 = arith.constant 4 : i32
    %31 = vector.broadcast %c4_i32 : i32 to vector<8x128xi32>
    %32 = arith.cmpi slt, %30, %31 : vector<8x128xi32>
    %33 = math.tanh %29 : vector<8x128xf32>
    %34 = arith.select %32, %33, %29 : vector<8x128xi1>, vector<8x128xf32>
    %c0_14 = arith.constant 0 : index
    %c0_15 = arith.constant 0 : index
    %35 = vector.load %arg4[%c0_14, %c0_15] : memref<8x128xf32, #tpu.memory_space<vmem>>, vector<8x128xf32>
    tpu.vector_store %arg4[%c0_14, %c0_15], %34 {strides = array<i32>} : memref<8x128xf32, #tpu.memory_space<vmem>>, vector<8x128xf32>,
    return
  }
  func.func @transform_0(%arg0: i32) -> (i32, i32) {
    %c0_i32 = arith.constant 0 : i32
    %c0_i32_0 = arith.constant 0 : i32
    return %arg0, %c0_i32 : i32, i32
  }
  func.func @transform_1(%arg0: i32) -> (i32, i32) {
    %c0_i32 = arith.constant 0 : i32
    %c0_i32_0 = arith.constant 0 : i32
    %c0_i32_1 = arith.constant 0 : i32
    return %c0_i32, %c0_i32_0 : i32, i32
  }
  func.func @transform_2(%arg0: i32) -> (i32, i32) {
    %c0_i32 = arith.constant 0 : i32
    %c0_i32_0 = arith.constant 0 : i32
    %c0_i32_1 = arith.constant 0 : i32
    return %c0_i32, %c0_i32_0 : i32, i32
  }
  func.func @transform_3(%arg0: i32) -> (i32, i32) {
    %c0_i32 = arith.constant 0 : i32
    %c0_i32_0 = arith.constant 0 : i32
    return %arg0, %c0_i32 : i32, i32
  }
}

</mosaic_0001>

<llo_original>
// kernel: ppo_policy_forward.1
$region0: #{ppo_policy_forward.1}
  #allocation0 [shape = 'u32[]', space=smem, size = 0x4, offset = 0x4, fixed_abs, tag = 'smem constant byte address 0x4 - core index']
  #allocation1 [shape = 'u32[144,128]{1,0:T(1,128)}', space=vmem, size = 0x12000, scoped, tag = 'internal scratch']
  %s0 = inlined_call_operand.vmem [shape: f32[8,16], index: 0, kind: input, shape index: {}]
  %s1 = inlined_call_operand.vmem [shape: bf16[192,160], index: 1, kind: input, shape index: {}]
  %s2 = inlined_call_operand.vmem [shape: bf16[288,128], index: 2, kind: input, shape index: {}]
  %s3 = inlined_call_operand.vmem [shape: f32[8,128], index: 3, kind: output, shape index: {}]
  %s4 = sld [smem:[#allocation0]]
  $region22: #{ppo_policy_forward.1} parent=0
    _
  %s6 = ssub.s32 1, %s4
  %s7 = scalar_select 0, %s6, %s4
  // Predicated region
  $region2: #{ppo_policy_forward.1} parent=0 // pred_check
    _
  $region3: #{ppo_policy_forward.1} parent=0 // pred_check_branch
    %9 = sbr.rel (0) target = $region5
  $region4: #{ppo_policy_forward.1} parent=0 // pred_region
    _
  $region5: #{ppo_policy_forward.1} parent=0 // pred_fallthru
    _
  // Predicated region
  $region6: #{ppo_policy_forward.1} parent=0 // pred_check
    _
  $region7: #{ppo_policy_forward.1} parent=0 // pred_check_branch
    %11 = sbr.rel (0) target = $region9
  $region8: #{ppo_policy_forward.1} parent=0 // pred_region
    _
  $region9: #{ppo_policy_forward.1} parent=0 // pred_fallthru
    _
  // Predicated region
  $region10: #{ppo_policy_forward.1} parent=0 // pred_check
    _
  $region11: #{ppo_policy_forward.1} parent=0 // pred_check_branch
    %13 = sbr.rel (0) target = $region13
  $region12: #{ppo_policy_forward.1} parent=0 // pred_region
    _
  $region13: #{ppo_policy_forward.1} parent=0 // pred_fallthru
    _
  %v14 = vld [vmem:[%s0] sm:$0xff]
  %v15 = vld [vmem:[%s1] sm:$0xff]
  %v16 = vld [vmem:[%s1 + $0x8] sm:$0xff]
  %v17 = vunpack.c.l.bf16 %v15
  %v18 = vunpack.c.h.bf16 %v15
  %v19 = vunpack.c.l.bf16 %v16
  %v20 = vunpack.c.h.bf16 %v16
  %v21 = vld [vmem:[%s1 + $0x10] sm:$0xff]
  %v22 = vld [vmem:[%s1 + $0x18] sm:$0xff]
  %v23 = vld [vmem:[%s1 + $0x20] sm:$0xff]
  %v24 = vld [vmem:[%s1 + $0x28] sm:$0xff]
  %v25 = vld [vmem:[%s1 + $0x30] sm:$0xff]
  %v26 = vld [vmem:[%s1 + $0x38] sm:$0xff]
  %v27 = vld [vmem:[%s1 + $0x40] sm:$0xff]
  %v28 = vld [vmem:[%s1 + $0x48] sm:$0xff]
  %v29 = vld [vmem:[%s1 + $0x50] sm:$0xff]
  %v30 = vld [vmem:[%s1 + $0x58] sm:$0xff]
  %v31 = vld [vmem:[%s1 + $0x60] sm:$0xff]
  %v32 = vld [vmem:[%s1 + $0x68] sm:$0xff]
  %v33 = vld [vmem:[%s1 + $0x70] sm:$0xff]
  %v34 = vld [vmem:[%s1 + $0x78] sm:$0xff]
  %v35 = vld [vmem:[%s1 + $0x80] sm:$0xff]
  %v36 = vld [vmem:[%s1 + $0x88] sm:$0xff]
  %v37 = vld [vmem:[%s1 + $0x90] sm:$0xff]
  %v38 = vld [vmem:[%s1 + $0x98] sm:$0xff]
  %v39 = vld [vmem:[%s1 + $0xa0] sm:$0xff]
  %v40 = vld [vmem:[%s1 + $0xa8] sm:$0xff]
  %v41 = vunpack.c.l.bf16 %v21
  %v42 = vunpack.c.h.bf16 %v21
  %v43 = vunpack.c.l.bf16 %v22
  %v44 = vunpack.c.h.bf16 %v22
  %v45 = vunpack.c.l.bf16 %v23
  %v46 = vunpack.c.h.bf16 %v23
  %v47 = vunpack.c.l.bf16 %v24
  %v48 = vunpack.c.h.bf16 %v24
  %v49 = vunpack.c.l.bf16 %v25
  %v50 = vunpack.c.h.bf16 %v25
  %v51 = vunpack.c.l.bf16 %v26
  %v52 = vunpack.c.h.bf16 %v26
  %v53 = vunpack.c.l.bf16 %v27
  %v54 = vunpack.c.h.bf16 %v27
  %v55 = vunpack.c.l.bf16 %v28
  %v56 = vunpack.c.h.bf16 %v28
  %v57 = vunpack.c.l.bf16 %v29
  %v58 = vunpack.c.h.bf16 %v29
  %v59 = vunpack.c.l.bf16 %v30
  %v60 = vunpack.c.h.bf16 %v30
  %v61 = vunpack.c.l.bf16 %v31
  %v62 = vunpack.c.h.bf16 %v31
  %v63 = vunpack.c.l.bf16 %v32
  %v64 = vunpack.c.h.bf16 %v32
  %v65 = vunpack.c.l.bf16 %v33
  %v66 = vunpack.c.h.bf16 %v33
  %v67 = vunpack.c.l.bf16 %v34
  %v68 = vunpack.c.h.bf16 %v34
  %v69 = vunpack.c.l.bf16 %v35
  %v70 = vunpack.c.h.bf16 %v35
  %v71 = vunpack.c.l.bf16 %v36
  %v72 = vunpack.c.h.bf16 %v36
  %v73 = vunpack.c.l.bf16 %v37
  %v74 = vunpack.c.h.bf16 %v37
  %v75 = vunpack.c.l.bf16 %v38
  %v76 = vunpack.c.h.bf16 %v38
  %v77 = vunpack.c.l.bf16 %v39
  %v78 = vunpack.c.h.bf16 %v39
  %v79 = vunpack.c.l.bf16 %v40
  %v80 = vunpack.c.h.bf16 %v40
  %v81 = vld [vmem:[%s1 + $0xb0] sm:$0xff]
  %v82 = vunpack.c.l.bf16 %v81
  %v83 = vunpack.c.h.bf16 %v81
  %v84 = vld [vmem:[%s2] sm:$0xf]
  %v85 = vld [vmem:[%s2 + $0x4] sm:$0xf]
  %v86 = vld [vmem:[%s2 + $0x8] sm:$0xf]
  %v87 = vld [vmem:[%s2 + $0xc] sm:$0xf]
  %v88 = vld [vmem:[%s2 + $0x10] sm:$0xf]
  %v89 = vld [vmem:[%s2 + $0x14] sm:$0xf]
  %v90 = vld [vmem:[%s2 + $0x18] sm:$0xf]
  %v91 = vld [vmem:[%s2 + $0x1c] sm:$0xf]
  %v92 = vld [vmem:[%s2 + $0x20] sm:$0xf]
  %v93 = vld [vmem:[%s2 + $0x24] sm:$0xf]
  %v94 = vld [vmem:[%s2 + $0x28] sm:$0xf]
  %v95 = vld [vmem:[%s2 + $0x2c] sm:$0xf]
  %v96 = vld [vmem:[%s2 + $0x30] sm:$0xf]
  %v97 = vld [vmem:[%s2 + $0x34] sm:$0xf]
  %v98 = vld [vmem:[%s2 + $0x38] sm:$0xf]
  %v99 = vld [vmem:[%s2 + $0x3c] sm:$0xf]
  %v100 = vld [vmem:[%s2 + $0x40] sm:$0xf]
  %v101 = vld [vmem:[%s2 + $0x44] sm:$0xf]
  %v102 = vld [vmem:[%s2 + $0x48] sm:$0xf]
  %v103 = vld [vmem:[%s2 + $0x4c] sm:$0xf]
  %v104 = vunpack.c.l.bf16 %v84
  %v105 = vunpack.c.l.bf16 %v85
  %v106 = vunpack.c.l.bf16 %v86
  %v107 = vunpack.c.l.bf16 %v87
  %v108 = vunpack.c.l.bf16 %v88
  %v109 = vunpack.c.l.bf16 %v89
  %v110 = vunpack.c.l.bf16 %v90
  %v111 = vunpack.c.l.bf16 %v91
  %v112 = vunpack.c.l.bf16 %v92
  %v113 = vunpack.c.l.bf16 %v93
  %v114 = vunpack.c.l.bf16 %v94
  %v115 = vunpack.c.l.bf16 %v95
  %v116 = vunpack.c.l.bf16 %v96
  %v117 = vunpack.c.l.bf16 %v97
  %v118 = vunpack.c.l.bf16 %v98
  %v119 = vunpack.c.l.bf16 %v99
  %v120 = vunpack.c.l.bf16 %v100
  %v121 = vunpack.c.l.bf16 %v101
  %v122 = vunpack.c.l.bf16 %v102
  %v123 = vunpack.c.l.bf16 %v103
  %v124 = vld [vmem:[%s2 + $0x50] sm:$0xf]
  %v125 = vld [vmem:[%s2 + $0x54] sm:$0xf]
  %v126 = vld [vmem:[%s2 + $0x58] sm:$0xf]
  %v127 = vld [vmem:[%s2 + $0x5c] sm:$0xf]
  %v128 = vld [vmem:[%s2 + $0x60] sm:$0xf]
  %v129 = vld [vmem:[%s2 + $0x64] sm:$0xf]
  %v130 = vld [vmem:[%s2 + $0x68] sm:$0xf]
  %v131 = vld [vmem:[%s2 + $0x6c] sm:$0xf]
  %v132 = vld [vmem:[%s2 + $0x70] sm:$0xf]
  %v133 = vld [vmem:[%s2 + $0x74] sm:$0xf]
  %v134 = vld [vmem:[%s2 + $0x78] sm:$0xf]
  %v135 = vld [vmem:[%s2 + $0x7c] sm:$0xf]
  %v136 = vld [vmem:[%s2 + $0x80] sm:$0xf]
  %v137 = vld [vmem:[%s2 + $0x84] sm:$0xf]
  %v138 = vld [vmem:[%s2 + $0x88] sm:$0xf]
  %v139 = vld [vmem:[%s2 + $0x8c] sm:$0xf]
  %v140 = vunpack.c.l.bf16 %v124
  %v141 = vunpack.c.l.bf16 %v125
  %v142 = vunpack.c.l.bf16 %v126
  %v143 = vunpack.c.l.bf16 %v127
  %v144 = vunpack.c.l.bf16 %v128
  %v145 = vunpack.c.l.bf16 %v129
  %v146 = vunpack.c.l.bf16 %v130
  %v147 = vunpack.c.l.bf16 %v131
  %v148 = vunpack.c.l.bf16 %v132
  %v149 = vunpack.c.l.bf16 %v133
  %v150 = vunpack.c.l.bf16 %v134
  %v151 = vunpack.c.l.bf16 %v135
  %v152 = vunpack.c.l.bf16 %v136
  %v153 = vunpack.c.l.bf16 %v137
  %v154 = vunpack.c.l.bf16 %v138
  %v155 = vunpack.c.l.bf16 %v139
  %vm156 = vcmask 130048
  %v158 = vsel %vm156, %v14, 0
  %160 = vmatprep.subr.mxu0 %v18
  %161 = vmatpush1.msra.mxu0 %v17
  %162 = vmatprep.subr.mxu0 %v20
  %163 = vmatpush1.msra.mxu0 %v19
  %164 = vmatprep.subr.mxu0 0.0
  %165 = vmatpush1.msra.mxu0 0.0
  %166 = vmatprep.subr.mxu0 0.0
  %167 = vmatpush1.msra.mxu0 0.0
  %168 = vmatprep.subr.mxu0 0.0
  %169 = vmatpush1.msra.mxu0 0.0
  %170 = vmatprep.subr.mxu0 0.0
  %171 = vmatpush1.msra.mxu0 0.0
  %172 = vmatprep.subr.mxu0 0.0
  %173 = vmatpush1.msra.mxu0 0.0
  %174 = vmatprep.subr.mxu0 0.0
  %175 = vmatpush1.msra.mxu0 0.0
  %176 = vmatprep.subr.mxu0 0.0
  %177 = vmatpush1.msra.mxu0 0.0
  %178 = vmatprep.subr.mxu0 0.0
  %179 = vmatpush1.msra.mxu0 0.0
  %180 = vmatprep.subr.mxu0 0.0
  %181 = vmatpush1.msra.mxu0 0.0
  %182 = vmatprep.subr.mxu0 0.0
  %183 = vmatpush1.msra.mxu0 0.0
  %184 = vmatprep.subr.mxu0 0.0
  %185 = vmatpush1.msra.mxu0 0.0
  %186 = vmatprep.subr.mxu0 0.0
  %187 = vmatpush1.msra.mxu0 0.0
  %188 = vmatprep.subr.mxu0 0.0
  %189 = vmatpush1.msra.mxu0 0.0
  %190 = vmatprep.subr.mxu0 0.0
  %191 = vmatpush1.msra.mxu0 0.0
  %192 = vmatprep.subr.mxu0 0.0
  %193 = vmatpush1.msra.mxu0 0.0
  %194 = vmatprep.subr.mxu0 0.0
  %195 = vmatpush1.msra.mxu0 0.0
  %196 = vmatprep.subr.mxu0 0.0
  %197 = vmatpush1.msra.mxu0 0.0
  %198 = vmatprep.subr.mxu0 0.0
  %199 = vmatpush1.msra.mxu0 0.0
  %200 = vmatprep.subr.mxu0 0.0
  %201 = vmatpush1.msra.mxu0 0.0
  %202 = vmatprep.subr.mxu0 0.0
  %203 = vmatpush1.msra.mxu0 0.0
  %204 = vmatprep.subr.mxu0 0.0
  %205 = vmatpush1.msra.mxu0 0.0
  %206 = vmatprep.subr.mxu0 0.0
  %207 = vmatpush1.msra.mxu0 0.0
  %208 = vmatprep.subr.mxu0 0.0
  %209 = vmatpush1.msra.mxu0 0.0
  %210 = vmatprep.subr.mxu0 0.0
  %211 = vmatpush1.msra.mxu0 0.0
  %212 = vmatprep.subr.mxu0 0.0
  %213 = vmatpush1.msra.mxu0 0.0
  %214 = vmatprep.subr.mxu0 0.0
  %215 = vmatpush1.msra.mxu0 0.0
  %216 = vmatprep.subr.mxu0 0.0
  %217 = vmatpush1.msra.mxu0 0.0
  %218 = vmatprep.subr.mxu0 0.0
  %219 = vmatpush1.msra.mxu0 0.0
  %220 = vmatprep.subr.mxu0 0.0
  %221 = vmatpush1.msra.mxu0 0.0
  %222 = vmatprep.subr.mxu0 0.0
  %223 = vmatpush1.msra.mxu0 0.0
  %224 = vmatprep.mubr.f32.mxu0 0.0
  %225 = vmatmul.mubr.f32.gmra.mrb[0].mxu0 %v158
  %v226 = vpop.f32.mrb[0].mxu0
  %v227 = vadd.f32 0.0, %v226
  %v228 = vpop.f32.mrb[0].mxu0
  %v229 = vadd.f32 0.0, %v228
  %230 = vdwg.mxu0
  %v231 = vmax.f32 %v227, 0.0
  %v232 = vmax.f32 %v229, 0.0
  %v233 = vlaneseq
  %v234 = vshrl.u32 %v233, 7
  %v235 = vsub.s32 0, %v234
  %v236 = vrot.slane %v82, %v235
  %v237 = vlaneseq
  %v238 = vshrl.u32 %v237, 7
  %v239 = vsub.s32 0, %v238
  %v240 = vrot.slane %v83, %v239
  %vm241 = vcmask 261120
  %v243 = vsel %vm241, %v232, 0
  %245 = vmatprep.subr.mxu0 %v42
  %246 = vmatpush1.msra.mxu0 %v41
  %247 = vmatprep.subr.mxu0 %v44
  %248 = vmatpush1.msra.mxu0 %v43
  %249 = vmatprep.subr.mxu0 %v46
  %250 = vmatpush1.msra.mxu0 %v45
  %251 = vmatprep.subr.mxu0 %v48
  %252 = vmatpush1.msra.mxu0 %v47
  %253 = vmatprep.subr.mxu0 %v50
  %254 = vmatpush1.msra.mxu0 %v49
  %255 = vmatprep.subr.mxu0 %v52
  %256 = vmatpush1.msra.mxu0 %v51
  %257 = vmatprep.subr.mxu0 %v54
  %258 = vmatpush1.msra.mxu0 %v53
  %259 = vmatprep.subr.mxu0 %v56
  %260 = vmatpush1.msra.mxu0 %v55
  %261 = vmatprep.subr.mxu0 %v58
  %262 = vmatpush1.msra.mxu0 %v57
  %263 = vmatprep.subr.mxu0 %v60
  %264 = vmatpush1.msra.mxu0 %v59
  %265 = vmatprep.subr.mxu0 %v62
  %266 = vmatpush1.msra.mxu0 %v61
  %267 = vmatprep.subr.mxu0 %v64
  %268 = vmatpush1.msra.mxu0 %v63
  %269 = vmatprep.subr.mxu0 %v66
  %270 = vmatpush1.msra.mxu0 %v65
  %271 = vmatprep.subr.mxu0 %v68
  %272 = vmatpush1.msra.mxu0 %v67
  %273 = vmatprep.subr.mxu0 %v70
  %274 = vmatpush1.msra.mxu0 %v69
  %275 = vmatprep.subr.mxu0 %v72
  %276 = vmatpush1.msra.mxu0 %v71
  %277 = vmatprep.subr.mxu0 %v74
  %278 = vmatpush1.msra.mxu0 %v73
  %279 = vmatprep.subr.mxu0 %v76
  %280 = vmatpush1.msra.mxu0 %v75
  %281 = vmatprep.subr.mxu0 %v78
  %282 = vmatpush1.msra.mxu0 %v77
  %283 = vmatprep.subr.mxu0 %v80
  %284 = vmatpush1.msra.mxu0 %v79
  %285 = vmatprep.subr.mxu0 0.0
  %286 = vmatpush1.msra.mxu0 0.0
  %287 = vmatprep.subr.mxu0 0.0
  %288 = vmatpush1.msra.mxu0 0.0
  %289 = vmatprep.subr.mxu0 0.0
  %290 = vmatpush1.msra.mxu0 0.0
  %291 = vmatprep.subr.mxu0 0.0
  %292 = vmatpush1.msra.mxu0 0.0
  %293 = vmatprep.subr.mxu0 0.0
  %294 = vmatpush1.msra.mxu0 0.0
  %295 = vmatprep.subr.mxu0 0.0
  %296 = vmatpush1.msra.mxu0 0.0
  %297 = vmatprep.subr.mxu0 0.0
  %298 = vmatpush1.msra.mxu0 0.0
  %299 = vmatprep.subr.mxu0 0.0
  %300 = vmatpush1.msra.mxu0 0.0
  %301 = vmatprep.subr.mxu0 0.0
  %302 = vmatpush1.msra.mxu0 0.0
  %303 = vmatprep.subr.mxu0 0.0
  %304 = vmatpush1.msra.mxu0 0.0
  %305 = vmatprep.subr.mxu0 0.0
  %306 = vmatpush1.msra.mxu0 0.0
  %307 = vmatprep.subr.mxu0 0.0
  %308 = vmatpush1.msra.mxu0 0.0
  %309 = vmatprep.mubr.f32.mxu0 %v243
  %310 = vmatmul.mubr.f32.gmra.mrb[0].mxu0 %v231
  %v311 = vpop.f32.mrb[0].mxu0
  %v312 = vadd.f32 %v236, %v311
  %v313 = vpop.f32.mrb[0].mxu0
  %v314 = vadd.f32 %v240, %v313
  %315 = vdwg.mxu0
  %v316 = vmax.f32 %v312, 0.0
  %v317 = vmax.f32 %v314, 0.0
  %v318 = vlaneseq
  %v319 = vshrl.u32 %v318, 7
  %v320 = vsub.s32 1, %v319
  %v321 = vrot.slane %v82, %v320
  %v323 = vsel %vm241, %v317, 0
  %325 = vmatprep.subr.mxu0 0.0
  %326 = vmatpush1.msra.mxu0 %v104
  %327 = vmatprep.subr.mxu0 0.0
  %328 = vmatpush1.msra.mxu0 %v105
  %329 = vmatprep.subr.mxu0 0.0
  %330 = vmatpush1.msra.mxu0 %v106
  %331 = vmatprep.subr.mxu0 0.0
  %332 = vmatpush1.msra.mxu0 %v107
  %333 = vmatprep.subr.mxu0 0.0
  %334 = vmatpush1.msra.mxu0 %v108
  %335 = vmatprep.subr.mxu0 0.0
  %336 = vmatpush1.msra.mxu0 %v109
  %337 = vmatprep.subr.mxu0 0.0
  %338 = vmatpush1.msra.mxu0 %v110
  %339 = vmatprep.subr.mxu0 0.0
  %340 = vmatpush1.msra.mxu0 %v111
  %341 = vmatprep.subr.mxu0 0.0
  %342 = vmatpush1.msra.mxu0 %v112
  %343 = vmatprep.subr.mxu0 0.0
  %344 = vmatpush1.msra.mxu0 %v113
  %345 = vmatprep.subr.mxu0 0.0
  %346 = vmatpush1.msra.mxu0 %v114
  %347 = vmatprep.subr.mxu0 0.0
  %348 = vmatpush1.msra.mxu0 %v115
  %349 = vmatprep.subr.mxu0 0.0
  %350 = vmatpush1.msra.mxu0 %v116
  %351 = vmatprep.subr.mxu0 0.0
  %352 = vmatpush1.msra.mxu0 %v117
  %353 = vmatprep.subr.mxu0 0.0
  %354 = vmatpush1.msra.mxu0 %v118
  %355 = vmatprep.subr.mxu0 0.0
  %356 = vmatpush1.msra.mxu0 %v119
  %357 = vmatprep.subr.mxu0 0.0
  %358 = vmatpush1.msra.mxu0 %v120
  %359 = vmatprep.subr.mxu0 0.0
  %360 = vmatpush1.msra.mxu0 %v121
  %361 = vmatprep.subr.mxu0 0.0
  %362 = vmatpush1.msra.mxu0 %v122
  %363 = vmatprep.subr.mxu0 0.0
  %364 = vmatpush1.msra.mxu0 %v123
  %365 = vmatprep.subr.mxu0 0.0
  %366 = vmatpush1.msra.mxu0 0.0
  %367 = vmatprep.subr.mxu0 0.0
  %368 = vmatpush1.msra.mxu0 0.0
  %369 = vmatprep.subr.mxu0 0.0
  %370 = vmatpush1.msra.mxu0 0.0
  %371 = vmatprep.subr.mxu0 0.0
  %372 = vmatpush1.msra.mxu0 0.0
  %373 = vmatprep.subr.mxu0 0.0
  %374 = vmatpush1.msra.mxu0 0.0
  %375 = vmatprep.subr.mxu0 0.0
  %376 = vmatpush1.msra.mxu0 0.0
  %377 = vmatprep.subr.mxu0 0.0
  %378 = vmatpush1.msra.mxu0 0.0
  %379 = vmatprep.subr.mxu0 0.0
  %380 = vmatpush1.msra.mxu0 0.0
  %381 = vmatprep.subr.mxu0 0.0
  %382 = vmatpush1.msra.mxu0 0.0
  %383 = vmatprep.subr.mxu0 0.0
  %384 = vmatpush1.msra.mxu0 0.0
  %385 = vmatprep.subr.mxu0 0.0
  %386 = vmatpush1.msra.mxu0 0.0
  %387 = vmatprep.subr.mxu0 0.0
  %388 = vmatpush1.msra.mxu0 0.0
  %389 = vmatprep.mubr.f32.mxu0 %v323
  %390 = vmatmul.mubr.f32.gmra.mrb[0].mxu0 %v316
  %v391 = vpop.f32.mrb[0].mxu0
  %v392 = vadd.f32 %v321, %v391
  %v393 = vpop.f32.mrb[0].mxu0
  %394 = vdwg.mxu0
  %v395 = vmax.f32 %v392, 0.0
  %v396 = vlaneseq
  %v397 = vshrl.u32 %v396, 7
  %v398 = vsub.s32 2, %v397
  %v399 = vrot.slane %v82, %v398
  %400 = vmatprep.subr.mxu0 0.0
  %401 = vmatpush1.msra.mxu0 %v140
  %402 = vmatprep.subr.mxu0 0.0
  %403 = vmatpush1.msra.mxu0 %v141
  %404 = vmatprep.subr.mxu0 0.0
  %405 = vmatpush1.msra.mxu0 %v142
  %406 = vmatprep.subr.mxu0 0.0
  %407 = vmatpush1.msra.mxu0 %v143
  %408 = vmatprep.subr.mxu0 0.0
  %409 = vmatpush1.msra.mxu0 %v144
  %410 = vmatprep.subr.mxu0 0.0
  %411 = vmatpush1.msra.mxu0 %v145
  %412 = vmatprep.subr.mxu0 0.0
  %413 = vmatpush1.msra.mxu0 %v146
  %414 = vmatprep.subr.mxu0 0.0
  %415 = vmatpush1.msra.mxu0 %v147
  %416 = vmatprep.subr.mxu0 0.0
  %417 = vmatpush1.msra.mxu0 %v148
  %418 = vmatprep.subr.mxu0 0.0
  %419 = vmatpush1.msra.mxu0 %v149
  %420 = vmatprep.subr.mxu0 0.0
  %421 = vmatpush1.msra.mxu0 %v150
  %422 = vmatprep.subr.mxu0 0.0
  %423 = vmatpush1.msra.mxu0 %v151
  %424 = vmatprep.subr.mxu0 0.0
  %425 = vmatpush1.msra.mxu0 %v152
  %426 = vmatprep.subr.mxu0 0.0
  %427 = vmatpush1.msra.mxu0 %v153
  %428 = vmatprep.subr.mxu0 0.0
  %429 = vmatpush1.msra.mxu0 %v154
  %430 = vmatprep.subr.mxu0 0.0
  %431 = vmatpush1.msra.mxu0 %v155
  %432 = vmatprep.subr.mxu0 0.0
  %433 = vmatpush1.msra.mxu0 0.0
  %434 = vmatprep.subr.mxu0 0.0
  %435 = vmatpush1.msra.mxu0 0.0
  %436 = vmatprep.subr.mxu0 0.0
  %437 = vmatpush1.msra.mxu0 0.0
  %438 = vmatprep.subr.mxu0 0.0
  %439 = vmatpush1.msra.mxu0 0.0
  %440 = vmatprep.subr.mxu0 0.0
  %441 = vmatpush1.msra.mxu0 0.0
  %442 = vmatprep.subr.mxu0 0.0
  %443 = vmatpush1.msra.mxu0 0.0
  %444 = vmatprep.subr.mxu0 0.0
  %445 = vmatpush1.msra.mxu0 0.0
  %446 = vmatprep.subr.mxu0 0.0
  %447 = vmatpush1.msra.mxu0 0.0
  %448 = vmatprep.subr.mxu0 0.0
  %449 = vmatpush1.msra.mxu0 0.0
  %450 = vmatprep.subr.mxu0 0.0
  %451 = vmatpush1.msra.mxu0 0.0
  %452 = vmatprep.subr.mxu0 0.0
  %453 = vmatpush1.msra.mxu0 0.0
  %454 = vmatprep.subr.mxu0 0.0
  %455 = vmatpush1.msra.mxu0 0.0
  %456 = vmatprep.subr.mxu0 0.0
  %457 = vmatpush1.msra.mxu0 0.0
  %458 = vmatprep.subr.mxu0 0.0
  %459 = vmatpush1.msra.mxu0 0.0
  %460 = vmatprep.subr.mxu0 0.0
  %461 = vmatpush1.msra.mxu0 0.0
  %462 = vmatprep.subr.mxu0 0.0
  %463 = vmatpush1.msra.mxu0 0.0
  %464 = vmatprep.mubr.f32.mxu0 0.0
  %465 = vmatmul.mubr.f32.gmra.mrb[0].mxu0 %v395
  %v466 = vpop.f32.mrb[0].mxu0
  %v467 = vadd.f32 %v399, %v466
  %v468 = vpop.f32.mrb[0].mxu0
  %469 = vdwg.mxu0
  %v470 = vlaneseq
  %v471 = vand.u32 %v470, 127
  %vm472 = vcmp.lt.s32.totalorder %v471, 4
  %v473 = vtanh.pop %v467
  %v474 = vsel %vm472, %v473, %v467
  %475 = vst [vmem:[%s3] sm:$0xff] %v474
  // Predicated region
  $region14: #{ppo_policy_forward.1} parent=0 // pred_check
    _
  $region15: #{ppo_policy_forward.1} parent=0 // pred_check_branch
    %477 = sbr.rel (0) target = $region17
  $region16: #{ppo_policy_forward.1} parent=0 // pred_region
    _
  $region17: #{ppo_policy_forward.1} parent=0 // pred_fallthru
    _
  // Predicated region
  $region18: #{ppo_policy_forward.1} parent=0 // pred_check
    _
  $region19: #{ppo_policy_forward.1} parent=0 // pred_check_branch
    %479 = sbr.rel (0) target = $region21
  $region20: #{ppo_policy_forward.1} parent=0 // pred_region
    _
  $region21: #{ppo_policy_forward.1} parent=0 // pred_fallthru
    _

</llo_original>
